<compile_context>
chip_gen: v5e
topology: v5e:2x2
jax: 0.10.0
libtpu: 0.0.40
codegen_flags: <defaults>
</compile_context>

<pallas_src>
import jax
import jax.numpy as jnp
from jax import lax
from jax.experimental import pallas as pl
from jax.experimental.pallas import tpu as pltpu


def _critic_kernel(s_ref, a_ref,
                   we_ref, be_ref,
                   w1e_ref, w1a_ref, b1_ref,
                   w2_ref, b2_ref,
                   w3r_ref, b3_ref,
                   q_ref):
    cdt = we_ref.dtype  # bf16 MXU-operand / epilogue dtype

    # ---- encoder: Linear(state_dim -> enc_dim) + ReLU -----------------------
    enc = jnp.dot(s_ref[...].astype(cdt), we_ref[...],
                  preferred_element_type=jnp.float32)
    enc = jnp.maximum(enc.astype(cdt) + be_ref[...], 0)           # bf16 epilogue

    # ---- layer 1: split matmul replaces concat([enc, action]) ---------------
    # h1 = enc @ W1[:enc_dim] + action @ W1[enc_dim:] + b1. Avoids the
    # non-128-aligned lane concat and any broadcast_to of the action.
    h1 = jnp.dot(enc, w1e_ref[...], preferred_element_type=jnp.float32)
    h1 = h1 + jnp.dot(a_ref[...].astype(cdt), w1a_ref[...],
                      preferred_element_type=jnp.float32)          # (1,H1) bcasts free
    h1 = jnp.maximum(h1.astype(cdt) + b1_ref[...], 0)

    # ---- layer 2: Linear(H1 -> H2) + ReLU ------------------------------------
    h2 = jnp.dot(h1, w2_ref[...], preferred_element_type=jnp.float32)
    h2 = jnp.maximum(h2.astype(cdt) + b2_ref[...], 0)

    # ---- output layer: Linear(H2 -> 1), computed lane-dense as (1, bt) ------
    # bf16 x bf16 with f32 accumulation (no multi-pass f32 MXU emulation).
    q = lax.dot_general(w3r_ref[...], h2,
                        dimension_numbers=(((1,), (1,)), ((), ())),
                        preferred_element_type=jnp.float32)
    q_ref[...] = (q + b3_ref[0, 0]).astype(q_ref.dtype)


_TILE_CAP = 2048   # comfortably inside every generation's VMEM budget (incl. v7x 64 MiB/TC)


def _round_up(n, m):
    return ((n + m - 1) // m) * m


def _pick_batch_tile(B):
    if B <= 512:
        # Single exact-fit tile: no partial blocks anywhere, negligible overhead.
        return B
    if B <= 2 * _TILE_CAP:
        # Exactly two tiles so both TensorCores on v7x get work under ("parallel",).
        # Round to 128 so the lane-dense output block stays unmasked and balanced.
        return _round_up(pl.cdiv(B, 2), 128)
    return _TILE_CAP


@jax.jit
def critic_forward(state, action, params):
    """Pallas-fused forward of CriticNetworkContinuous. Returns (B, 1) Q-values."""
    we, be, w1e, w1a, b1, w2, b2, w3r, b3 = params
    B, state_dim = state.shape
    enc_dim = we.shape[1]
    n_actions = w1a.shape[0]
    h1_dim = w1e.shape[1]
    h2_dim = w2.shape[1]

    # Torch-style action broadcasting semantics (resolved from static shapes).
    if action.ndim == 1:
        action = action.reshape(1, -1)
    assert action.shape[-1] == n_actions, "action feature dim mismatch"
    broadcast_action = (action.shape[0] == 1) and (B > 1)

    b_tile = _pick_batch_tile(B)
    num_tiles = pl.cdiv(B, b_tile)
    # Only the *output* is lane-padded (it is produced in-kernel anyway, no extra HBM
    # read); inputs are never padded/copied — the final partial input block is handled
    # by Pallas boundary masking and those rows are discarded by the [:B] slice below.
    out_cols = num_tiles * b_tile

    if broadcast_action:
        a_spec = pl.BlockSpec((1, n_actions), lambda i: (0, 0))
    else:
        a_spec = pl.BlockSpec((b_tile, n_actions), lambda i: (i, 0))

    def resident(shape):
        # Constant index_map: weights/biases stay resident in VMEM across the grid.
        return pl.BlockSpec(shape, lambda i: (0, 0))

    flops = 2 * num_tiles * b_tile * (state_dim * enc_dim
                                      + enc_dim * h1_dim + n_actions * h1_dim
                                      + h1_dim * h2_dim
                                      + h2_dim)
    weight_bytes = sum(int(w.size) * w.dtype.itemsize
                       for w in (we, be, w1e, w1a, b1, w2, b2, w3r, b3))
    bytes_accessed = (B * state_dim * state.dtype.itemsize
                      + int(action.size) * action.dtype.itemsize
                      + out_cols * 4 + weight_bytes)

    out = pl.pallas_call(
        _critic_kernel,
        grid=(num_tiles,),
        in_specs=[
            pl.BlockSpec((b_tile, state_dim), lambda i: (i, 0)),          # state tile
            a_spec,                                                       # action tile / bcast row
            resident(we.shape), resident(be.shape),                       # encoder
            resident(w1e.shape), resident(w1a.shape), resident(b1.shape), # layer 1 (split)
            resident(w2.shape), resident(b2.shape),                       # layer 2
            resident(w3r.shape),                                          # output row (1, H2)
            pl.BlockSpec(memory_space=pltpu.MemorySpace.SMEM),            # scalar bias b3
        ],
        out_specs=pl.BlockSpec((1, b_tile), lambda i: (0, i)),            # lane-dense q row
        out_shape=jax.ShapeDtypeStruct((1, out_cols), jnp.float32),
        compiler_params=pltpu.CompilerParams(
            dimension_semantics=("parallel",),
            vmem_limit_bytes=32 * 1024 * 1024,
        ),
        cost_estimate=pl.CostEstimate(
            flops=flops, transcendentals=0, bytes_accessed=bytes_accessed),
    )(state, action, we, be, w1e, w1a, b1, w2, b2, w3r, b3)

    return out[0, :B].reshape(B, 1)


def init_params(key, state_dim, enc_dim, n_actions, hidden_dims=(256, 256),
                weight_dtype=jnp.bfloat16):
    """Deterministic init mimicking torch.nn.Linear's U(-1/sqrt(fan_in), 1/sqrt(fan_in)).

    Weights stored as (in_features, out_features) (transposed vs torch) in bf16.
    Layer-1 weight is pre-split into (encoder-part, action-part) so the kernel never
    concatenates along the lane axis. Final-layer weight is a bf16 (1, H2) row;
    its scalar bias is an f32 (1, 1) array destined for SMEM.
    """
    def linear(k, fan_in, fan_out):
        kw, kb = jax.random.split(k)
        bound = 1.0 / (fan_in ** 0.5)
        w = jax.random.uniform(kw, (fan_in, fan_out), jnp.float32, -bound, bound)
        b = jax.random.uniform(kb, (1, fan_out), jnp.float32, -bound, bound)
        return w, b

    h1d, h2d = hidden_dims
    k_enc, k1, k2, k3 = jax.random.split(key, 4)
    we, be = linear(k_enc, state_dim, enc_dim)
    w1, b1 = linear(k1, enc_dim + n_actions, h1d)
    w2, b2 = linear(k2, h1d, h2d)
    w3, b3 = linear(k3, h2d, 1)
    wd = weight_dtype
    return (we.astype(wd), be.astype(wd),
            w1[:enc_dim].astype(wd), w1[enc_dim:].astype(wd), b1.astype(wd),
            w2.astype(wd), b2.astype(wd),
            jnp.transpose(w3).astype(wd),   # (1, H2) bf16 row -> single-pass MXU
            b3.reshape(1, 1))               # f32 scalar bias -> SMEM


def _reference_forward(state, action, params):
    """Plain-JAX f32 reference (same stored, bf16-quantized weights) for correctness."""
    we, be, w1e, w1a, b1, w2, b2, w3r, b3 = params
    we, be, w1e, w1a, b1, w2, b2, w3r = (
        a.astype(jnp.float32) for a in (we, be, w1e, w1a, b1, w2, b2, w3r))
    B = state.shape[0]
    if action.ndim == 1:
        action = action.reshape(1, -1)
    if action.shape[0] == 1 and B > 1:
        action = jnp.tile(action, (B, 1))
    enc = jnp.maximum(state @ we + be, 0.0)
    h1 = jnp.maximum(enc @ w1e + action @ w1a + b1, 0.0)
    h2 = jnp.maximum(h1 @ w2 + b2, 0.0)
    return h2 @ w3r.T + b3


if __name__ == "__main__":
    B, STATE_DIM, ENC_DIM, N_ACTIONS = 2, 16, 32, 4

    key = jax.random.PRNGKey(0)
    k_state, k_action, k_params = jax.random.split(key, 3)

    state = jax.random.normal(k_state, (B, STATE_DIM), jnp.float32)
    action = jax.random.normal(k_action, (B, N_ACTIONS), jnp.float32)
    params = init_params(k_params, STATE_DIM, ENC_DIM, N_ACTIONS)

    # 1) Per-row actions (single exact-fit tile path).
    q = jax.block_until_ready(critic_forward(state, action, params))
    q_ref = _reference_forward(state, action, params)
    assert q.shape == (B, 1)
    assert jnp.allclose(q, q_ref, atol=3e-2, rtol=3e-2), (q, q_ref)

    # 2) Broadcast (1, n_actions) action across the batch (torch `repeat` path).
    a1 = action[:1]
    qb = jax.block_until_ready(critic_forward(state, a1, params))
    qb_ref = _reference_forward(state, a1, params)
    assert qb.shape == (B, 1)
    assert jnp.allclose(qb, qb_ref, atol=3e-2, rtol=3e-2), (qb, qb_ref)

    # 3) Multi-tile path with a partial final input block (no wrapper-side padding).
    B2 = 600
    k_s2, k_a2 = jax.random.split(jax.random.PRNGKey(1))
    state2 = jax.random.normal(k_s2, (B2, STATE_DIM), jnp.float32)
    action2 = jax.random.normal(k_a2, (B2, N_ACTIONS), jnp.float32)
    q2 = jax.block_until_ready(critic_forward(state2, action2, params))
    q2_ref = _reference_forward(state2, action2, params)
    assert q2.shape == (B2, 1)
    assert jnp.allclose(q2, q2_ref, atol=3e-2, rtol=3e-2)

    print("KERNEL_OK")
</pallas_src>

<mosaic_0001>
module attributes {stable_mosaic.version = 11 : i64} {
  func.func @_critic_kernel(%arg0: i32, %arg1: memref<2x16xf32, #tpu.memory_space<vmem>>, %arg2: memref<2x4xf32, #tpu.memory_space<vmem>>, %arg3: memref<16x32xbf16, #tpu.memory_space<vmem>>, %arg4: memref<1x32xbf16, #tpu.memory_space<vmem>>, %arg5: memref<32x256xbf16, #tpu.memory_space<vmem>>, %arg6: memref<4x256xbf16, #tpu.memory_space<vmem>>, %arg7: memref<1x256xbf16, #tpu.memory_space<vmem>>, %arg8: memref<256x256xbf16, #tpu.memory_space<vmem>>, %arg9: memref<1x256xbf16, #tpu.memory_space<vmem>>, %arg10: memref<1x256xbf16, #tpu.memory_space<vmem>>, %arg11: memref<1x1xf32, #tpu.memory_space<smem>>, %arg12: memref<1x2xf32, #tpu.memory_space<vmem>>) attributes {dimension_semantics = [#tpu.dimension_semantics<parallel>], iteration_bounds = array<i64: 1>, scalar_prefetch = 0 : i64, scratch_operands = 0 : i64, tpu.core_type = #tpu.core_type<tc>, window_params = [{transform_indices = @transform_0, window_bounds = array<i64: 2, 16>}, {transform_indices = @transform_1, window_bounds = array<i64: 2, 4>}, {pipeline_mode = #tpu.pipeline_mode<synchronous>, transform_indices = @transform_2, window_bounds = array<i64: 16, 32>}, {pipeline_mode = #tpu.pipeline_mode<synchronous>, transform_indices = @transform_3, window_bounds = array<i64: 1, 32>}, {pipeline_mode = #tpu.pipeline_mode<synchronous>, transform_indices = @transform_4, window_bounds = array<i64: 32, 256>}, {pipeline_mode = #tpu.pipeline_mode<synchronous>, transform_indices = @transform_5, window_bounds = array<i64: 4, 256>}, {pipeline_mode = #tpu.pipeline_mode<synchronous>, transform_indices = @transform_6, window_bounds = array<i64: 1, 256>}, {pipeline_mode = #tpu.pipeline_mode<synchronous>, transform_indices = @transform_7, window_bounds = array<i64: 256, 256>}, {pipeline_mode = #tpu.pipeline_mode<synchronous>, transform_indices = @transform_8, window_bounds = array<i64: 1, 256>}, {pipeline_mode = #tpu.pipeline_mode<synchronous>, transform_indices = @transform_9, window_bounds = array<i64: 1, 256>}, {transform_indices = @transform_10, window_bounds = array<i64: 1, 1>}, {transform_indices = @transform_11, window_bounds = array<i64: 1, 2>}]} {
    %c0 = arith.constant 0 : index
    %c0_0 = arith.constant 0 : index
    %0 = vector.load %arg1[%c0, %c0_0] : memref<2x16xf32, #tpu.memory_space<vmem>>, vector<2x16xf32>
    %1 = arith.truncf %0 : vector<2x16xf32> to vector<2x16xbf16>
    %c0_1 = arith.constant 0 : index
    %c0_2 = arith.constant 0 : index
    %2 = vector.load %arg3[%c0_1, %c0_2] : memref<16x32xbf16, #tpu.memory_space<vmem>>, vector<16x32xbf16>
    %cst = arith.constant dense<0.000000e+00> : vector<2x32xf32>
    %3 = tpu.matmul %1, %2, %cst {dimension_numbers = #tpu.dot_dimension_numbers<[1], [0], [0], [1], [0, 0, 1, 1], [], []>} : vector<2x16xbf16>, vector<16x32xbf16>, vector<2x32xf32> -> vector<2x32xf32>
    %4 = arith.truncf %3 : vector<2x32xf32> to vector<2x32xbf16>
    %c0_3 = arith.constant 0 : index
    %c0_4 = arith.constant 0 : index
    %5 = vector.load %arg4[%c0_3, %c0_4] : memref<1x32xbf16, #tpu.memory_space<vmem>>, vector<1x32xbf16>
    %6 = vector.broadcast %5 : vector<1x32xbf16> to vector<2x32xbf16>
    %7 = arith.addf %4, %6 : vector<2x32xbf16>
    %cst_5 = arith.constant 0.000000e+00 : bf16
    %8 = vector.broadcast %cst_5 : bf16 to vector<2x32xbf16>
    %9 = arith.maximumf %7, %8 : vector<2x32xbf16>
    %c0_6 = arith.constant 0 : index
    %c0_7 = arith.constant 0 : index
    %10 = vector.load %arg5[%c0_6, %c0_7] : memref<32x256xbf16, #tpu.memory_space<vmem>>, vector<32x256xbf16>
    %cst_8 = arith.constant dense<0.000000e+00> : vector<2x256xf32>
    %11 = tpu.matmul %9, %10, %cst_8 {dimension_numbers = #tpu.dot_dimension_numbers<[1], [0], [0], [1], [0, 0, 1, 1], [], []>} : vector<2x32xbf16>, vector<32x256xbf16>, vector<2x256xf32> -> vector<2x256xf32>
    %c0_9 = arith.constant 0 : index
    %c0_10 = arith.constant 0 : index
    %12 = vector.load %arg2[%c0_9, %c0_10] : memref<2x4xf32, #tpu.memory_space<vmem>>, vector<2x4xf32>
    %13 = arith.truncf %12 : vector<2x4xf32> to vector<2x4xbf16>
    %c0_11 = arith.constant 0 : index
    %c0_12 = arith.constant 0 : index
    %14 = vector.load %arg6[%c0_11, %c0_12] : memref<4x256xbf16, #tpu.memory_space<vmem>>, vector<4x256xbf16>
    %cst_13 = arith.constant dense<0.000000e+00> : vector<2x256xf32>
    %15 = tpu.matmul %13, %14, %cst_13 {dimension_numbers = #tpu.dot_dimension_numbers<[1], [0], [0], [1], [0, 0, 1, 1], [], []>} : vector<2x4xbf16>, vector<4x256xbf16>, vector<2x256xf32> -> vector<2x256xf32>
    %16 = arith.addf %11, %15 : vector<2x256xf32>
    %17 = arith.truncf %16 : vector<2x256xf32> to vector<2x256xbf16>
    %c0_14 = arith.constant 0 : index
    %c0_15 = arith.constant 0 : index
    %18 = vector.load %arg7[%c0_14, %c0_15] : memref<1x256xbf16, #tpu.memory_space<vmem>>, vector<1x256xbf16>
    %19 = vector.broadcast %18 : vector<1x256xbf16> to vector<2x256xbf16>
    %20 = arith.addf %17, %19 : vector<2x256xbf16>
    %cst_16 = arith.constant 0.000000e+00 : bf16
    %21 = vector.broadcast %cst_16 : bf16 to vector<2x256xbf16>
    %22 = arith.maximumf %20, %21 : vector<2x256xbf16>
    %c0_17 = arith.constant 0 : index
    %c0_18 = arith.constant 0 : index
    %23 = vector.load %arg8[%c0_17, %c0_18] : memref<256x256xbf16, #tpu.memory_space<vmem>>, vector<256x256xbf16>
    %cst_19 = arith.constant dense<0.000000e+00> : vector<2x256xf32>
    %24 = tpu.matmul %22, %23, %cst_19 {dimension_numbers = #tpu.dot_dimension_numbers<[1], [0], [0], [1], [0, 0, 1, 1], [], []>} : vector<2x256xbf16>, vector<256x256xbf16>, vector<2x256xf32> -> vector<2x256xf32>
    %25 = arith.truncf %24 : vector<2x256xf32> to vector<2x256xbf16>
    %c0_20 = arith.constant 0 : index
    %c0_21 = arith.constant 0 : index
    %26 = vector.load %arg9[%c0_20, %c0_21] : memref<1x256xbf16, #tpu.memory_space<vmem>>, vector<1x256xbf16>
    %27 = vector.broadcast %26 : vector<1x256xbf16> to vector<2x256xbf16>
    %28 = arith.addf %25, %27 : vector<2x256xbf16>
    %cst_22 = arith.constant 0.000000e+00 : bf16
    %29 = vector.broadcast %cst_22 : bf16 to vector<2x256xbf16>
    %30 = arith.maximumf %28, %29 : vector<2x256xbf16>
    %c0_23 = arith.constant 0 : index
    %c0_24 = arith.constant 0 : index
    %31 = vector.load %arg10[%c0_23, %c0_24] : memref<1x256xbf16, #tpu.memory_space<vmem>>, vector<1x256xbf16>
    %cst_25 = arith.constant dense<0.000000e+00> : vector<1x2xf32>
    %32 = tpu.matmul %31, %30, %cst_25 {dimension_numbers = #tpu.dot_dimension_numbers<[1], [1], [0], [0], [0, 0, 1, 0], [], []>} : vector<1x256xbf16>, vector<2x256xbf16>, vector<1x2xf32> -> vector<1x2xf32>
    %c0_26 = arith.constant 0 : index
    %c0_27 = arith.constant 0 : index
    %33 = memref.load %arg11[%c0_26, %c0_27] : memref<1x1xf32, #tpu.memory_space<smem>>
    %34 = vector.broadcast %33 : f32 to vector<1x2xf32>
    %35 = arith.addf %32, %34 : vector<1x2xf32>
    %c0_28 = arith.constant 0 : index
    %c0_29 = arith.constant 0 : index
    %36 = vector.load %arg12[%c0_28, %c0_29] : memref<1x2xf32, #tpu.memory_space<vmem>>, vector<1x2xf32>
    tpu.vector_store %arg12[%c0_28, %c0_29], %35 {strides = array<i32>} : memref<1x2xf32, #tpu.memory_space<vmem>>, vector<1x2xf32>,
    return
  }
  func.func @transform_0(%arg0: i32) -> (i32, i32) {
    %c0_i32 = arith.constant 0 : i32
    %c0_i32_0 = arith.constant 0 : i32
    return %arg0, %c0_i32 : i32, i32
  }
  func.func @transform_1(%arg0: i32) -> (i32, i32) {
    %c0_i32 = arith.constant 0 : i32
    %c0_i32_0 = arith.constant 0 : i32
    return %arg0, %c0_i32 : i32, i32
  }
  func.func @transform_2(%arg0: i32) -> (i32, i32) {
    %c0_i32 = arith.constant 0 : i32
    %c0_i32_0 = arith.constant 0 : i32
    %c0_i32_1 = arith.constant 0 : i32
    return %c0_i32, %c0_i32_0 : i32, i32
  }
  func.func @transform_3(%arg0: i32) -> (i32, i32) {
    %c0_i32 = arith.constant 0 : i32
    %c0_i32_0 = arith.constant 0 : i32
    %c0_i32_1 = arith.constant 0 : i32
    return %c0_i32, %c0_i32_0 : i32, i32
  }
  func.func @transform_4(%arg0: i32) -> (i32, i32) {
    %c0_i32 = arith.constant 0 : i32
    %c0_i32_0 = arith.constant 0 : i32
    %c0_i32_1 = arith.constant 0 : i32
    return %c0_i32, %c0_i32_0 : i32, i32
  }
  func.func @transform_5(%arg0: i32) -> (i32, i32) {
    %c0_i32 = arith.constant 0 : i32
    %c0_i32_0 = arith.constant 0 : i32
    %c0_i32_1 = arith.constant 0 : i32
    return %c0_i32, %c0_i32_0 : i32, i32
  }
  func.func @transform_6(%arg0: i32) -> (i32, i32) {
    %c0_i32 = arith.constant 0 : i32
    %c0_i32_0 = arith.constant 0 : i32
    %c0_i32_1 = arith.constant 0 : i32
    return %c0_i32, %c0_i32_0 : i32, i32
  }
  func.func @transform_7(%arg0: i32) -> (i32, i32) {
    %c0_i32 = arith.constant 0 : i32
    %c0_i32_0 = arith.constant 0 : i32
    %c0_i32_1 = arith.constant 0 : i32
    return %c0_i32, %c0_i32_0 : i32, i32
  }
  func.func @transform_8(%arg0: i32) -> (i32, i32) {
    %c0_i32 = arith.constant 0 : i32
    %c0_i32_0 = arith.constant 0 : i32
    %c0_i32_1 = arith.constant 0 : i32
    return %c0_i32, %c0_i32_0 : i32, i32
  }
  func.func @transform_9(%arg0: i32) -> (i32, i32) {
    %c0_i32 = arith.constant 0 : i32
    %c0_i32_0 = arith.constant 0 : i32
    %c0_i32_1 = arith.constant 0 : i32
    return %c0_i32, %c0_i32_0 : i32, i32
  }
  func.func @transform_10(%arg0: i32) -> (i32, i32) {
    %c0_i32 = arith.constant 0 : i32
    %c0_i32_0 = arith.constant 0 : i32
    %c0_i32_1 = arith.constant 0 : i32
    return %c0_i32, %c0_i32_0 : i32, i32
  }
  func.func @transform_11(%arg0: i32) -> (i32, i32) {
    %c0_i32 = arith.constant 0 : i32
    %c0_i32_0 = arith.constant 0 : i32
    return %c0_i32, %arg0 : i32, i32
  }
}

</mosaic_0001>

<llo_original>
// kernel: critic_forward.1
$region0: #{critic_forward.1}
  #allocation0 [shape = 'u32[]', space=smem, size = 0x4, offset = 0x4, fixed_abs, tag = 'smem constant byte address 0x4 - core index']
  #allocation1 [shape = 'u32[72,128]{1,0:T(1,128)}', space=vmem, size = 0x9000, scoped, tag = 'internal scratch']
  #allocation2 [shape = 'f32[1,1]{1,0:T(1,128)S(6)}', space=smem, size = 0x200, scoped, tag = 'scoped memory for critic_forward.1']
  %s0 = inlined_call_operand.vmem [shape: f32[2,16], index: 0, kind: input, shape index: {}]
  %s1 = inlined_call_operand.hbm [shape: f32[2,4], index: 1, kind: input, shape index: {}]
  %s2 = inlined_call_operand.hbm [shape: bf16[16,32], index: 2, kind: input, shape index: {}]
  %s3 = inlined_call_operand.hbm [shape: bf16[1,32], index: 3, kind: input, shape index: {}]
  %s4 = inlined_call_operand.hbm [shape: bf16[32,256], index: 4, kind: input, shape index: {}]
  %s5 = inlined_call_operand.vmem [shape: bf16[4,256], index: 5, kind: input, shape index: {}]
  %s6 = inlined_call_operand.hbm [shape: bf16[1,256], index: 6, kind: input, shape index: {}]
  %s7 = inlined_call_operand.hbm [shape: bf16[256,256], index: 7, kind: input, shape index: {}]
  %s8 = inlined_call_operand.vmem [shape: bf16[1,256], index: 8, kind: input, shape index: {}]
  %s9 = inlined_call_operand.vmem [shape: bf16[1,256], index: 9, kind: input, shape index: {}]
  %s10 = inlined_call_operand.<no memory space> [shape: f32[1,1], index: 10, kind: input, shape index: {}]
  %s11 = inlined_call_operand.hbm [shape: f32[1,2], index: 11, kind: output, shape index: {}]
  %s12 = sld [smem:[#allocation0]]
  $region78: #{critic_forward.1} parent=0
    _
  %s14 = ssub.s32 1, %s12
  %s15 = scalar_select 0, %s14, %s12
  %16 = sst [smem:[#allocation2]] %s10
  $region1: #{critic_forward.1} parent=0
    #allocation3 [shape = 'u8[1024]{0}', space=vmem, size = 0x400, scoped, tag = 'input window, operand 1, single buffered']
    #allocation4 [shape = 's32[1]{0}', space=sflag, size = 0x4, scoped, tag = 'scoped memory for critic_forward.1']
    #allocation5 [shape = 's32[1]{0}', space=sflag, size = 0x4, scoped, tag = 'scoped memory for critic_forward.1']
    #allocation6 [shape = 'u8[4096]{0}', space=vmem, size = 0x1000, scoped, tag = 'input window, operand 2, single buffered']
    #allocation7 [shape = 's32[1]{0}', space=sflag, size = 0x4, scoped, tag = 'scoped memory for critic_forward.1']
    #allocation8 [shape = 'u8[512]{0}', space=vmem, size = 0x400, scoped, tag = 'input window, operand 3, single buffered']
    #allocation9 [shape = 'u8[16384]{0}', space=vmem, size = 0x4000, scoped, tag = 'input window, operand 4, single buffered']
    #allocation10 [shape = 's32[1]{0}', space=sflag, size = 0x4, scoped, tag = 'scoped memory for critic_forward.1']
    #allocation11 [shape = 'u8[1024]{0}', space=vmem, size = 0x400, scoped, tag = 'input window, operand 6, single buffered']
    #allocation12 [shape = 'u8[131072]{0}', space=vmem, size = 0x20000, scoped, tag = 'input window, operand 7, single buffered']
    #allocation13 [shape = 's32[1]{0}', space=sflag, size = 0x4, scoped, tag = 'scoped memory for critic_forward.1']
    #allocation14 [shape = 'u8[512]{0}', space=vmem, size = 0x400, scoped, tag = 'output window, operand 0, single buffered']
    %17 = vsyncpa [#allocation4], 0
    %18 = vsyncpa [#allocation7], 0
    %19 = vsyncpa [#allocation10], 0
    %20 = vsyncpa [#allocation13], 0
    %21 = vsyncpa [#allocation5], 0
    // Predicated region
    $region2: #{critic_forward.1} parent=1 // pred_check
      _
    $region3: #{critic_forward.1} parent=1 // pred_check_branch
      %23 = sbr.rel (0) target = $region5
    $region4: #{critic_forward.1} parent=1 // pred_region
      _
    $region5: #{critic_forward.1} parent=1 // pred_fallthru
      _
    // Predicated region
    $region6: #{critic_forward.1} parent=1 // pred_check
      _
    $region7: #{critic_forward.1} parent=1 // pred_check_branch
      %25 = sbr.rel (0) target = $region9
    $region8: #{critic_forward.1} parent=1 // pred_region
      %27 = vsyncadd [#allocation4], 0
      %s29 = sshll.u32 %s1, 4
      %s30 = int_to_ptr.hbm [resolvable:$true] %s29
      %s31 = sshll.u32 [#allocation3], 4
      %s32 = int_to_ptr.vmem [resolvable:$true] %s31
      %34 = dma.hbm_to_vmem [thread:$0]  %s30, 32, %s32, [#allocation4]
    $region9: #{critic_forward.1} parent=1 // pred_fallthru
      _
    // Predicated region
    $region10: #{critic_forward.1} parent=1 // pred_check
      _
    $region11: #{critic_forward.1} parent=1 // pred_check_branch
      %36 = sbr.rel (0) target = $region13
    $region12: #{critic_forward.1} parent=1 // pred_region
      %38 = vsyncadd [#allocation7], 0
      %s39 = sshll.u32 %s2, 4
      %s40 = int_to_ptr.hbm [resolvable:$true] %s39
      %s41 = sshll.u32 [#allocation6], 4
      %s42 = int_to_ptr.vmem [resolvable:$true] %s41
      %47 = dma.hbm_to_vmem [thread:$0]  %s40, 128, %s42, [#allocation7], 64, 64, 4
    $region13: #{critic_forward.1} parent=1 // pred_fallthru
      _
    // Predicated region
    $region14: #{critic_forward.1} parent=1 // pred_check
      _
    $region15: #{critic_forward.1} parent=1 // pred_check_branch
      %49 = sbr.rel (0) target = $region17
    $region16: #{critic_forward.1} parent=1 // pred_region
      %51 = vsyncadd [#allocation7], 0
      %s53 = sshll.u32 %s3, 4
      %s54 = int_to_ptr.hbm [resolvable:$true] %s53
      %s55 = sshll.u32 [#allocation8], 4
      %s56 = int_to_ptr.vmem [resolvable:$true] %s55
      %58 = dma.hbm_to_vmem [thread:$0]  %s54, 16, %s56, [#allocation7]
    $region17: #{critic_forward.1} parent=1 // pred_fallthru
      _
    // Predicated region
    $region18: #{critic_forward.1} parent=1 // pred_check
      _
    $region19: #{critic_forward.1} parent=1 // pred_check_branch
      %60 = sbr.rel (0) target = $region21
    $region20: #{critic_forward.1} parent=1 // pred_region
      %62 = vsyncadd [#allocation10], 0
      %s63 = sshll.u32 %s4, 4
      %s64 = int_to_ptr.hbm [resolvable:$true] %s63
      %s65 = sshll.u32 [#allocation9], 4
      %s66 = int_to_ptr.vmem [resolvable:$true] %s65
      %71 = dma.hbm_to_vmem [thread:$0]  %s64, 512, %s66, [#allocation10], 128, 128, 8
    $region21: #{critic_forward.1} parent=1 // pred_fallthru
      _
    // Predicated region
    $region22: #{critic_forward.1} parent=1 // pred_check
      _
    $region23: #{critic_forward.1} parent=1 // pred_check_branch
      %73 = sbr.rel (0) target = $region25
    $region24: #{critic_forward.1} parent=1 // pred_region
      _
    $region25: #{critic_forward.1} parent=1 // pred_fallthru
      _
    // Predicated region
    $region26: #{critic_forward.1} parent=1 // pred_check
      _
    $region27: #{critic_forward.1} parent=1 // pred_check_branch
      %75 = sbr.rel (0) target = $region29
    $region28: #{critic_forward.1} parent=1 // pred_region
      %77 = vsyncadd [#allocation10], 0
      %s79 = sshll.u32 %s6, 4
      %s80 = int_to_ptr.hbm [resolvable:$true] %s79
      %s81 = sshll.u32 [#allocation11], 4
      %s82 = int_to_ptr.vmem [resolvable:$true] %s81
      %84 = dma.hbm_to_vmem [thread:$0]  %s80, 32, %s82, [#allocation10]
    $region29: #{critic_forward.1} parent=1 // pred_fallthru
      _
    // Predicated region
    $region30: #{critic_forward.1} parent=1 // pred_check
      _
    $region31: #{critic_forward.1} parent=1 // pred_check_branch
      %86 = sbr.rel (0) target = $region33
    $region32: #{critic_forward.1} parent=1 // pred_region
      %88 = vsyncadd [#allocation13], 0
      %s89 = sshll.u32 %s7, 4
      %s90 = int_to_ptr.hbm [resolvable:$true] %s89
      %s91 = sshll.u32 [#allocation12], 4
      %s92 = int_to_ptr.vmem [resolvable:$true] %s91
      %97 = dma.hbm_to_vmem [thread:$0]  %s90, 4096, %s92, [#allocation13], 128, 128, 8
    $region33: #{critic_forward.1} parent=1 // pred_fallthru
      _
    // Predicated region
    $region34: #{critic_forward.1} parent=1 // pred_check
      _
    $region35: #{critic_forward.1} parent=1 // pred_check_branch
      %99 = sbr.rel (0) target = $region37
    $region36: #{critic_forward.1} parent=1 // pred_region
      _
    $region37: #{critic_forward.1} parent=1 // pred_fallthru
      _
    // Predicated region
    $region38: #{critic_forward.1} parent=1 // pred_check
      _
    $region39: #{critic_forward.1} parent=1 // pred_check_branch
      %101 = sbr.rel (0) target = $region41
    $region40: #{critic_forward.1} parent=1 // pred_region
      _
    $region41: #{critic_forward.1} parent=1 // pred_fallthru
      _
    // Predicated region
    $region42: #{critic_forward.1} parent=1 // pred_check
      _
    $region43: #{critic_forward.1} parent=1 // pred_check_branch
      %103 = sbr.rel (0) target = $region45
    $region44: #{critic_forward.1} parent=1 // pred_region
      _
    $region45: #{critic_forward.1} parent=1 // pred_fallthru
      _
    // Predicated region
    $region46: #{critic_forward.1} parent=1 // pred_check
      _
    $region47: #{critic_forward.1} parent=1 // pred_check_branch
      %105 = sbr.rel (0) target = $region49
    $region48: #{critic_forward.1} parent=1 // pred_region
      %107 = dma.done [#allocation4], 32
    $region49: #{critic_forward.1} parent=1 // pred_fallthru
      _
    // Predicated region
    $region50: #{critic_forward.1} parent=1 // pred_check
      _
    $region51: #{critic_forward.1} parent=1 // pred_check_branch
      %109 = sbr.rel (0) target = $region53
    $region52: #{critic_forward.1} parent=1 // pred_region
      %111 = dma.done [#allocation7], 128
    $region53: #{critic_forward.1} parent=1 // pred_fallthru
      _
    // Predicated region
    $region54: #{critic_forward.1} parent=1 // pred_check
      _
    $region55: #{critic_forward.1} parent=1 // pred_check_branch
      %113 = sbr.rel (0) target = $region57
    $region56: #{critic_forward.1} parent=1 // pred_region
      %115 = dma.done [#allocation7], 16
    $region57: #{critic_forward.1} parent=1 // pred_fallthru
      _
    // Predicated region
    $region58: #{critic_forward.1} parent=1 // pred_check
      _
    $region59: #{critic_forward.1} parent=1 // pred_check_branch
      %117 = sbr.rel (0) target = $region61
    $region60: #{critic_forward.1} parent=1 // pred_region
      %119 = dma.done [#allocation10], 512
    $region61: #{critic_forward.1} parent=1 // pred_fallthru
      _
    // Predicated region
    $region62: #{critic_forward.1} parent=1 // pred_check
      _
    $region63: #{critic_forward.1} parent=1 // pred_check_branch
      %121 = sbr.rel (0) target = $region65
    $region64: #{critic_forward.1} parent=1 // pred_region
      %123 = dma.done [#allocation10], 32
    $region65: #{critic_forward.1} parent=1 // pred_fallthru
      _
    // Predicated region
    $region66: #{critic_forward.1} parent=1 // pred_check
      _
    $region67: #{critic_forward.1} parent=1 // pred_check_branch
      %125 = sbr.rel (0) target = $region69
    $region68: #{critic_forward.1} parent=1 // pred_region
      %127 = dma.done [#allocation13], 4096
    $region69: #{critic_forward.1} parent=1 // pred_fallthru
      _
    %v129 = vld [vmem:[%s0] sm:$0x3]
    %v130 = vpack.c.bf16 %v129, %v129
    %v131 = vld [vmem:[#allocation6] sm:$0xf]
    %v132 = vld [vmem:[#allocation6 + $0x4] sm:$0xf]
    %v135 = vunpack.c.l.b16 %v131
    %v136 = vunpack.c.l.b16 %v132
    %v137 = vpack.c.b16 %v136, %v135
    %vm139 = vcmask 130048
    %v141 = vsel %vm139, %v130, 0
    %143 = vmatpush.bf16.msra.mxu0 0
    %144 = vmatpush.bf16.msra.mxu0 0
    %145 = vmatpush.bf16.msra.mxu0 0
    %146 = vmatpush.bf16.msra.mxu0 0
    %147 = vmatpush.bf16.msra.mxu0 0
    %148 = vmatpush.bf16.msra.mxu0 0
    %149 = vmatpush.bf16.msra.mxu0 0
    %150 = vmatpush.bf16.msra.mxu0 %v137
    %151 = vmatmul.bf16.gmra.mxu0 %v141
    %v152 = vpop.f32.mrf.mxu0
    %v153 = vadd.f32 0.0, %v152
    %v154 = vpop.f32.mrf.mxu0
    %155 = vdwg.mxu0
    %v156 = vpack.c.bf16 %v153, %v153
    %v157 = vld [vmem:[#allocation8] sm:$0x1]
    %v159 = vpack.i.b16 %v157, %v157
    %v161 = vperm.slane %v159, 0
    %v162 = vunpack.c.l.bf16 %v156
    %v163 = vunpack.c.l.bf16 %v161
    %v164 = vadd.f32 %v162, %v163
    %v165 = vpack.c.bf16 %v164, %v164
    %v166 = vunpack.c.l.bf16 %v165
    %v167 = vmax.f32 %v166, 0.0
    %v168 = vpack.c.bf16 %v167, %v167
    %v169 = vld [vmem:[#allocation9] sm:$0xff]
    %v170 = vld [vmem:[#allocation9 + $0x8] sm:$0xff]
    %v171 = vld [vmem:[#allocation9 + $0x10] sm:$0xff]
    %v172 = vld [vmem:[#allocation9 + $0x18] sm:$0xff]
    %v173 = vld [vmem:[#allocation3] sm:$0x3]
    %v174 = vpack.c.bf16 %v173, %v173
    %v175 = vld [vmem:[%s5] sm:$0xf]
    %177 = vst [vmem:[#allocation1] ss:$4 sm:$0xff] %v175
    %v178 = vld.sshfl [vmem:[#allocation1] sm:$0xff pattern:$0x73625140]
    %v179 = vld.sshfl [vmem:[#allocation1 + $0x8] sm:$0xff pattern:$0x73625140]
    %vm180 = vcmask 31744
    %v182 = vsel %vm180, %v174, 0
    %vm184 = vcmask 1041408
    %v185 = vsel %vm184, %v178, 0
    %v187 = vsel %vm184, %v179, 0
    %189 = vmatpush.bf16.msra.mxu0 0
    %190 = vmatpush.bf16.msra.mxu0 0
    %191 = vmatpush.bf16.msra.mxu0 0
    %192 = vmatpush.bf16.msra.mxu0 0
    %193 = vmatpush.bf16.msra.mxu0 0
    %194 = vmatpush.bf16.msra.mxu0 0
    %195 = vmatpush.bf16.msra.mxu0 0
    %196 = vmatpush.bf16.msra.mxu0 %v185
    %197 = vmatmul.bf16.gmra.mxu0 %v182
    %v198 = vpop.f32.mrf.mxu0
    %v199 = vadd.f32 0.0, %v198
    %v200 = vpop.f32.mrf.mxu0
    %201 = vdwg.mxu0
    %202 = vmatpush.bf16.msra.mxu0 0
    %203 = vmatpush.bf16.msra.mxu0 0
    %204 = vmatpush.bf16.msra.mxu0 0
    %205 = vmatpush.bf16.msra.mxu0 0
    %206 = vmatpush.bf16.msra.mxu0 0
    %207 = vmatpush.bf16.msra.mxu0 0
    %208 = vmatpush.bf16.msra.mxu0 0
    %209 = vmatpush.bf16.msra.mxu0 %v187
    %210 = vmatmul.bf16.gmra.mxu0 %v182
    %v211 = vpop.f32.mrf.mxu0
    %v212 = vadd.f32 0.0, %v211
    %v213 = vpop.f32.mrf.mxu0
    %214 = vdwg.mxu0
    %v219 = vunpack.c.l.b16 %v169
    %v220 = vunpack.c.h.b16 %v169
    %v221 = vunpack.c.l.b16 %v170
    %v222 = vunpack.c.h.b16 %v170
    %v223 = vunpack.c.l.b16 %v171
    %v224 = vunpack.c.h.b16 %v171
    %v225 = vunpack.c.l.b16 %v172
    %v226 = vunpack.c.h.b16 %v172
    %v227 = vpack.c.b16 %v221, %v219
    %v228 = vpack.c.b16 %v222, %v220
    %v229 = vpack.c.b16 %v225, %v223
    %v230 = vpack.c.b16 %v226, %v224
    %vm235 = vcmask 261120
    %v237 = vsel %vm235, %v168, 0
    %239 = vmatpush.bf16.msra.mxu0 0
    %240 = vmatpush.bf16.msra.mxu0 0
    %241 = vmatpush.bf16.msra.mxu0 0
    %242 = vmatpush.bf16.msra.mxu0 0
    %243 = vmatpush.bf16.msra.mxu0 0
    %244 = vmatpush.bf16.msra.mxu0 0
    %245 = vmatpush.bf16.msra.mxu0 %v229
    %246 = vmatpush.bf16.msra.mxu0 %v227
    %247 = vmatmul.bf16.gmra.mxu0 %v237
    %v248 = vpop.f32.mrf.mxu0
    %v249 = vadd.f32 %v199, %v248
    %v250 = vpop.f32.mrf.mxu0
    %251 = vdwg.mxu0
    %252 = vmatpush.bf16.msra.mxu0 0
    %253 = vmatpush.bf16.msra.mxu0 0
    %254 = vmatpush.bf16.msra.mxu0 0
    %255 = vmatpush.bf16.msra.mxu0 0
    %256 = vmatpush.bf16.msra.mxu0 0
    %257 = vmatpush.bf16.msra.mxu0 0
    %258 = vmatpush.bf16.msra.mxu0 %v230
    %259 = vmatpush.bf16.msra.mxu0 %v228
    %260 = vmatmul.bf16.gmra.mxu0 %v237
    %v261 = vpop.f32.mrf.mxu0
    %v262 = vadd.f32 %v212, %v261
    %v263 = vpop.f32.mrf.mxu0
    %264 = vdwg.mxu0
    %v265 = vpack.c.bf16 %v262, %v249
    %v266 = vld [vmem:[#allocation11] sm:$0x3]
    %268 = vst [vmem:[#allocation1] ss:$9 sm:$0xff] %v266
    %v269 = vld [vmem:[#allocation1] sm:$0xff]
    %v270 = vld [vmem:[#allocation1 + $0x9] sm:$0xff]
    %v271 = vpack.i.b16 %v269, %v269
    %v273 = vperm.slane %v271, 0
    %v274 = vpack.i.b16 %v270, %v270
    %v276 = vperm.slane %v274, 0
    %v277 = vunpack.c.l.bf16 %v265
    %v278 = vunpack.c.h.bf16 %v265
    %v279 = vunpack.c.l.bf16 %v273
    %v280 = vunpack.c.l.bf16 %v276
    %v281 = vadd.f32 %v277, %v279
    %v282 = vadd.f32 %v278, %v280
    %v283 = vpack.c.bf16 %v282, %v281
    %v284 = vunpack.c.l.bf16 %v283
    %v285 = vunpack.c.h.bf16 %v283
    %v286 = vmax.f32 %v284, 0.0
    %v287 = vmax.f32 %v285, 0.0
    %v288 = vpack.c.bf16 %v286, %v286
    %v289 = vpack.c.bf16 %v287, %v287
    %v290 = vld [vmem:[#allocation12] sm:$0xff]
    %v291 = vld [vmem:[#allocation12 + $0x8] sm:$0xff]
    %v292 = vld [vmem:[#allocation12 + $0x10] sm:$0xff]
    %v293 = vld [vmem:[#allocation12 + $0x18] sm:$0xff]
    %v294 = vld [vmem:[#allocation12 + $0x20] sm:$0xff]
    %v295 = vld [vmem:[#allocation12 + $0x28] sm:$0xff]
    %v296 = vld [vmem:[#allocation12 + $0x30] sm:$0xff]
    %v297 = vld [vmem:[#allocation12 + $0x38] sm:$0xff]
    %v298 = vld [vmem:[#allocation12 + $0x40] sm:$0xff]
    %v299 = vld [vmem:[#allocation12 + $0x48] sm:$0xff]
    %v300 = vld [vmem:[#allocation12 + $0x50] sm:$0xff]
    %v301 = vld [vmem:[#allocation12 + $0x58] sm:$0xff]
    %v302 = vld [vmem:[#allocation12 + $0x60] sm:$0xff]
    %v303 = vld [vmem:[#allocation12 + $0x68] sm:$0xff]
    %v304 = vld [vmem:[#allocation12 + $0x70] sm:$0xff]
    %v305 = vld [vmem:[#allocation12 + $0x78] sm:$0xff]
    %v306 = vld [vmem:[#allocation12 + $0x80] sm:$0xff]
    %v307 = vld [vmem:[#allocation12 + $0x88] sm:$0xff]
    %v308 = vld [vmem:[#allocation12 + $0x90] sm:$0xff]
    %v309 = vld [vmem:[#allocation12 + $0x98] sm:$0xff]
    %v310 = vld [vmem:[#allocation12 + $0xa0] sm:$0xff]
    %v311 = vld [vmem:[#allocation12 + $0xa8] sm:$0xff]
    %v312 = vld [vmem:[#allocation12 + $0xb0] sm:$0xff]
    %v313 = vld [vmem:[#allocation12 + $0xb8] sm:$0xff]
    %v314 = vld [vmem:[#allocation12 + $0xc0] sm:$0xff]
    %v315 = vld [vmem:[#allocation12 + $0xc8] sm:$0xff]
    %v316 = vld [vmem:[#allocation12 + $0xd0] sm:$0xff]
    %v317 = vld [vmem:[#allocation12 + $0xd8] sm:$0xff]
    %v318 = vld [vmem:[#allocation12 + $0xe0] sm:$0xff]
    %v319 = vld [vmem:[#allocation12 + $0xe8] sm:$0xff]
    %v320 = vld [vmem:[#allocation12 + $0xf0] sm:$0xff]
    %v321 = vld [vmem:[#allocation12 + $0xf8] sm:$0xff]
    %v354 = vunpack.c.l.b16 %v290
    %v355 = vunpack.c.h.b16 %v290
    %v356 = vunpack.c.l.b16 %v291
    %v357 = vunpack.c.h.b16 %v291
    %v358 = vunpack.c.l.b16 %v292
    %v359 = vunpack.c.h.b16 %v292
    %v360 = vunpack.c.l.b16 %v293
    %v361 = vunpack.c.h.b16 %v293
    %v362 = vunpack.c.l.b16 %v294
    %v363 = vunpack.c.h.b16 %v294
    %v364 = vunpack.c.l.b16 %v295
    %v365 = vunpack.c.h.b16 %v295
    %v366 = vunpack.c.l.b16 %v296
    %v367 = vunpack.c.h.b16 %v296
    %v368 = vunpack.c.l.b16 %v297
    %v369 = vunpack.c.h.b16 %v297
    %v370 = vunpack.c.l.b16 %v298
    %v371 = vunpack.c.h.b16 %v298
    %v372 = vunpack.c.l.b16 %v299
    %v373 = vunpack.c.h.b16 %v299
    %v374 = vunpack.c.l.b16 %v300
    %v375 = vunpack.c.h.b16 %v300
    %v376 = vunpack.c.l.b16 %v301
    %v377 = vunpack.c.h.b16 %v301
    %v378 = vunpack.c.l.b16 %v302
    %v379 = vunpack.c.h.b16 %v302
    %v380 = vunpack.c.l.b16 %v303
    %v381 = vunpack.c.h.b16 %v303
    %v382 = vunpack.c.l.b16 %v304
    %v383 = vunpack.c.h.b16 %v304
    %v384 = vunpack.c.l.b16 %v305
    %v385 = vunpack.c.h.b16 %v305
    %v386 = vunpack.c.l.b16 %v306
    %v387 = vunpack.c.h.b16 %v306
    %v388 = vunpack.c.l.b16 %v307
    %v389 = vunpack.c.h.b16 %v307
    %v390 = vunpack.c.l.b16 %v308
    %v391 = vunpack.c.h.b16 %v308
    %v392 = vunpack.c.l.b16 %v309
    %v393 = vunpack.c.h.b16 %v309
    %v394 = vunpack.c.l.b16 %v310
    %v395 = vunpack.c.h.b16 %v310
    %v396 = vunpack.c.l.b16 %v311
    %v397 = vunpack.c.h.b16 %v311
    %v398 = vunpack.c.l.b16 %v312
    %v399 = vunpack.c.h.b16 %v312
    %v400 = vunpack.c.l.b16 %v313
    %v401 = vunpack.c.h.b16 %v313
    %v402 = vunpack.c.l.b16 %v314
    %v403 = vunpack.c.h.b16 %v314
    %v404 = vunpack.c.l.b16 %v315
    %v405 = vunpack.c.h.b16 %v315
    %v406 = vunpack.c.l.b16 %v316
    %v407 = vunpack.c.h.b16 %v316
    %v408 = vunpack.c.l.b16 %v317
    %v409 = vunpack.c.h.b16 %v317
    %v410 = vunpack.c.l.b16 %v318
    %v411 = vunpack.c.h.b16 %v318
    %v412 = vunpack.c.l.b16 %v319
    %v413 = vunpack.c.h.b16 %v319
    %v414 = vunpack.c.l.b16 %v320
    %v415 = vunpack.c.h.b16 %v320
    %v416 = vunpack.c.l.b16 %v321
    %v417 = vunpack.c.h.b16 %v321
    %v418 = vpack.c.b16 %v356, %v354
    %v419 = vpack.c.b16 %v357, %v355
    %v420 = vpack.c.b16 %v360, %v358
    %v421 = vpack.c.b16 %v361, %v359
    %v422 = vpack.c.b16 %v364, %v362
    %v423 = vpack.c.b16 %v365, %v363
    %v424 = vpack.c.b16 %v368, %v366
    %v425 = vpack.c.b16 %v369, %v367
    %v426 = vpack.c.b16 %v372, %v370
    %v427 = vpack.c.b16 %v373, %v371
    %v428 = vpack.c.b16 %v376, %v374
    %v429 = vpack.c.b16 %v377, %v375
    %v430 = vpack.c.b16 %v380, %v378
    %v431 = vpack.c.b16 %v381, %v379
    %v432 = vpack.c.b16 %v384, %v382
    %v433 = vpack.c.b16 %v385, %v383
    %v434 = vpack.c.b16 %v388, %v386
    %v435 = vpack.c.b16 %v389, %v387
    %v436 = vpack.c.b16 %v392, %v390
    %v437 = vpack.c.b16 %v393, %v391
    %v438 = vpack.c.b16 %v396, %v394
    %v439 = vpack.c.b16 %v397, %v395
    %v440 = vpack.c.b16 %v400, %v398
    %v441 = vpack.c.b16 %v401, %v399
    %v442 = vpack.c.b16 %v404, %v402
    %v443 = vpack.c.b16 %v405, %v403
    %v444 = vpack.c.b16 %v408, %v406
    %v445 = vpack.c.b16 %v409, %v407
    %v446 = vpack.c.b16 %v412, %v410
    %v447 = vpack.c.b16 %v413, %v411
    %v448 = vpack.c.b16 %v416, %v414
    %v449 = vpack.c.b16 %v417, %v415
    %482 = vmatpush.bf16.msra.mxu0 %v432
    %483 = vmatpush.bf16.msra.mxu0 %v430
    %484 = vmatpush.bf16.msra.mxu0 %v428
    %485 = vmatpush.bf16.msra.mxu0 %v426
    %486 = vmatpush.bf16.msra.mxu0 %v424
    %487 = vmatpush.bf16.msra.mxu0 %v422
    %488 = vmatpush.bf16.msra.mxu0 %v420
    %489 = vmatpush.bf16.msra.mxu0 %v418
    %490 = vmatmul.bf16.gmra.mxu0 %v288
    %v491 = vpop.f32.mrf.mxu0
    %v492 = vadd.f32 0.0, %v491
    %v493 = vpop.f32.mrf.mxu0
    %494 = vdwg.mxu0
    %495 = vmatpush.bf16.msra.mxu0 %v448
    %496 = vmatpush.bf16.msra.mxu0 %v446
    %497 = vmatpush.bf16.msra.mxu0 %v444
    %498 = vmatpush.bf16.msra.mxu0 %v442
    %499 = vmatpush.bf16.msra.mxu0 %v440
    %500 = vmatpush.bf16.msra.mxu0 %v438
    %501 = vmatpush.bf16.msra.mxu0 %v436
    %502 = vmatpush.bf16.msra.mxu0 %v434
    %503 = vmatmul.bf16.gmra.mxu0 %v289
    %v504 = vpop.f32.mrf.mxu0
    %v505 = vadd.f32 %v492, %v504
    %v506 = vpop.f32.mrf.mxu0
    %507 = vdwg.mxu0
    %508 = vmatpush.bf16.msra.mxu0 %v433
    %509 = vmatpush.bf16.msra.mxu0 %v431
    %510 = vmatpush.bf16.msra.mxu0 %v429
    %511 = vmatpush.bf16.msra.mxu0 %v427
    %512 = vmatpush.bf16.msra.mxu0 %v425
    %513 = vmatpush.bf16.msra.mxu0 %v423
    %514 = vmatpush.bf16.msra.mxu0 %v421
    %515 = vmatpush.bf16.msra.mxu0 %v419
    %516 = vmatmul.bf16.gmra.mxu0 %v288
    %v517 = vpop.f32.mrf.mxu0
    %v518 = vadd.f32 0.0, %v517
    %v519 = vpop.f32.mrf.mxu0
    %520 = vdwg.mxu0
    %521 = vmatpush.bf16.msra.mxu0 %v449
    %522 = vmatpush.bf16.msra.mxu0 %v447
    %523 = vmatpush.bf16.msra.mxu0 %v445
    %524 = vmatpush.bf16.msra.mxu0 %v443
    %525 = vmatpush.bf16.msra.mxu0 %v441
    %526 = vmatpush.bf16.msra.mxu0 %v439
    %527 = vmatpush.bf16.msra.mxu0 %v437
    %528 = vmatpush.bf16.msra.mxu0 %v435
    %529 = vmatmul.bf16.gmra.mxu0 %v289
    %v530 = vpop.f32.mrf.mxu0
    %v531 = vadd.f32 %v518, %v530
    %v532 = vpop.f32.mrf.mxu0
    %533 = vdwg.mxu0
    %v534 = vpack.c.bf16 %v531, %v505
    %v535 = vld [vmem:[%s8] sm:$0x3]
    %537 = vst [vmem:[#allocation1] ss:$9 sm:$0xff] %v535
    %v538 = vld [vmem:[#allocation1] sm:$0xff]
    %v539 = vld [vmem:[#allocation1 + $0x9] sm:$0xff]
    %v540 = vpack.i.b16 %v538, %v538
    %v542 = vperm.slane %v540, 0
    %v543 = vpack.i.b16 %v539, %v539
    %v545 = vperm.slane %v543, 0
    %v546 = vunpack.c.l.bf16 %v534
    %v547 = vunpack.c.h.bf16 %v534
    %v548 = vunpack.c.l.bf16 %v542
    %v549 = vunpack.c.l.bf16 %v545
    %v550 = vadd.f32 %v546, %v548
    %v551 = vadd.f32 %v547, %v549
    %v552 = vpack.c.bf16 %v551, %v550
    %v553 = vunpack.c.l.bf16 %v552
    %v554 = vunpack.c.h.bf16 %v552
    %v555 = vmax.f32 %v553, 0.0
    %v556 = vmax.f32 %v554, 0.0
    %v557 = vpack.c.bf16 %v555, %v555
    %v558 = vpack.c.bf16 %v556, %v556
    %v559 = vld [vmem:[%s9] sm:$0x3]
    %s560 = sld [smem:[#allocation2]]
    %v561 = vstv %s560
    %563 = vst [vmem:[#allocation1] ss:$9 sm:$0xff] %v559
    %v564 = vld [vmem:[#allocation1] sm:$0xff]
    %v565 = vld [vmem:[#allocation1 + $0x9] sm:$0xff]
    %568 = vmatpush.bf16.xpose.msra.mxu0 0
    %569 = vmatpush.bf16.xpose.msra.mxu0 0
    %570 = vmatpush.bf16.xpose.msra.mxu0 0
    %571 = vmatpush.bf16.xpose.msra.mxu0 0
    %572 = vmatpush.bf16.xpose.msra.mxu0 0
    %573 = vmatpush.bf16.xpose.msra.mxu0 0
    %574 = vmatpush.bf16.xpose.msra.mxu0 0
    %575 = vmatpush.bf16.xpose.msra.mxu0 %v557
    %576 = vmatmul.bf16.gmra.mxu0 %v564
    %v577 = vpop.f32.mrf.mxu0
    %v578 = vadd.f32 %v561, %v577
    %v579 = vpop.f32.mrf.mxu0
    %580 = vdwg.mxu0
    %581 = vmatpush.bf16.xpose.msra.mxu0 0
    %582 = vmatpush.bf16.xpose.msra.mxu0 0
    %583 = vmatpush.bf16.xpose.msra.mxu0 0
    %584 = vmatpush.bf16.xpose.msra.mxu0 0
    %585 = vmatpush.bf16.xpose.msra.mxu0 0
    %586 = vmatpush.bf16.xpose.msra.mxu0 0
    %587 = vmatpush.bf16.xpose.msra.mxu0 0
    %588 = vmatpush.bf16.xpose.msra.mxu0 %v558
    %589 = vmatmul.bf16.gmra.mxu0 %v565
    %v590 = vpop.f32.mrf.mxu0
    %v591 = vadd.f32 %v578, %v590
    %v592 = vpop.f32.mrf.mxu0
    %593 = vdwg.mxu0
    %vm594 = vcmask 8192
    %595 = vst.msk [vmem:[#allocation14] sm:$0x1] %vm594, %v591
    // Predicated region
    $region70: #{critic_forward.1} parent=1 // pred_check
      _
    $region71: #{critic_forward.1} parent=1 // pred_check_branch
      %597 = sbr.rel (0) target = $region73
    $region72: #{critic_forward.1} parent=1 // pred_region
      %599 = vsyncadd [#allocation5], 0
      %s601 = sshll.u32 [#allocation14], 4
      %s602 = int_to_ptr.vmem [resolvable:$true] %s601
      %s603 = sshll.u32 %s11, 4
      %s604 = int_to_ptr.hbm [resolvable:$true] %s603
      %606 = dma.vmem_to_hbm [thread:$0]  %s602, 16, %s604, [#allocation5]
    $region73: #{critic_forward.1} parent=1 // pred_fallthru
      _
    // Predicated region
    $region74: #{critic_forward.1} parent=1 // pred_check
      _
    $region75: #{critic_forward.1} parent=1 // pred_check_branch
      %608 = sbr.rel (0) target = $region77
    $region76: #{critic_forward.1} parent=1 // pred_region
      %610 = dma.done [#allocation5], 16
    $region77: #{critic_forward.1} parent=1 // pred_fallthru
      _
    %611 = vsyncpa [#allocation4], 1
    %612 = vsyncpa [#allocation7], 1
    %613 = vsyncpa [#allocation10], 1
    %614 = vsyncpa [#allocation13], 1
    %615 = vsyncpa [#allocation5], 1

</llo_original>
